<compile_context>
chip_gen: v6e
topology: v6e:2x2x1
jax: 0.10.0
libtpu: 0.0.40
codegen_flags: <defaults>
</compile_context>

<pallas_src>
import functools

import jax
import jax.numpy as jnp
from jax.experimental import pallas as pl
from jax.experimental.pallas import tpu as pltpu


# ----------------------------- Pallas kernel ------------------------------ #
def _coupling_conv_kernel(x0_ref, x1_ref, w_ref, m_ref, y_ref, *, H, W):
    """y = x0 + conv3x3_same(x1) + bias for G images per grid step.

    Per-step shapes (GC = G*C):
      x0_ref, y_ref : (GC, HW)        residual stream / output (lane-dense)
      x1_ref        : (GC, HW)        conv input (NCHW flattened)
      w_ref         : (GC, 9*GC + 1)  fused block-diagonal weight + bias column
      m_ref         : (9, HW)         precomputed zero-padding masks (resident)
    """
    HW = H * W

    # Keep all arithmetic in f32 regardless of the HBM I/O dtype (v5e-safe).
    x1 = x1_ref[...].astype(jnp.float32)        # (GC, HW)
    x0 = x0_ref[...].astype(jnp.float32)        # (GC, HW)
    masks = m_ref[...]                          # (9, HW) f32, resident

    # Build the nine shifted & zero-padded taps and stack them along sublanes.
    # The lane shift is circular (pltpu.roll, XLU slot); wrapped-around lanes
    # are exactly the ones killed by the static padding mask.
    taps = []
    for di in (-1, 0, 1):
        for dj in (-1, 0, 1):
            k = (di + 1) * 3 + (dj + 1)
            s = di * W + dj                      # flattened source offset
            shifted = pltpu.roll(x1, (-s) % HW, 1) if s != 0 else x1
            taps.append(shifted * masks[k:k + 1, :])
    taps.append(jnp.ones((1, HW), jnp.float32))  # constant-1 tap -> bias
    taps = jnp.concatenate(taps, axis=0)         # (9*GC + 1, HW)

    # One fused MXU matmul does all 9 taps, all G images, and the bias add.
    acc = jnp.dot(w_ref[...], taps, preferred_element_type=jnp.float32)
    y_ref[...] = (x0 + acc).astype(y_ref.dtype)


def _coupling_conv(x0_2d, x1_2d, w_full, mask9, *, H, W, group_c, io_dtype):
    """y_2d = x0_2d + conv3x3(x1_2d) + bias, operating on (B*C, H*W) slabs."""
    BC, HW = x1_2d.shape
    grid = (BC // group_c,)
    kernel = functools.partial(_coupling_conv_kernel, H=H, W=W)
    return pl.pallas_call(
        kernel,
        out_shape=jax.ShapeDtypeStruct((BC, HW), io_dtype),
        grid_spec=pltpu.PrefetchScalarGridSpec(
            num_scalar_prefetch=0,
            grid=grid,
            in_specs=[
                pl.BlockSpec((group_c, HW), lambda b: (b, 0)),     # x0 residual
                pl.BlockSpec((group_c, HW), lambda b: (b, 0)),     # x1 conv in
                pl.BlockSpec(w_full.shape, lambda b: (0, 0)),      # fused W (resident)
                pl.BlockSpec(mask9.shape, lambda b: (0, 0)),       # pad masks (resident)
            ],
            out_specs=pl.BlockSpec((group_c, HW), lambda b: (b, 0)),
        ),
        compiler_params=pltpu.CompilerParams(
            dimension_semantics=("parallel",)),
        # y reuses x0's HBM buffer when x0 is donated (x0 is consumed by the
        # reversible block); without donation XLA keeps x0 intact.
        input_output_aliases={0: 0},
    )(x0_2d, x1_2d, w_full, mask9)


# --------------------------- host-side helpers ----------------------------- #
def _choose_group(B, C, HW, itemsize=4, budget=4 << 20):
    """Images per grid step: biggest divisor of B within a VMEM budget,
    preferring groups whose G*C fills whole 8-sublane groups."""
    candidates = [g for g in range(1, B + 1)
                  if B % g == 0 and g * C * HW * itemsize <= budget]
    if not candidates:
        return 1
    aligned = [g for g in candidates if (g * C) % 8 == 0 or g == B]
    return max(aligned or candidates)


def _build_fused_weight(weight, bias, G):
    """(GC, 9*GC + 1) block-diagonal tap-major weight with bias folded in.

    W[g*C+co, k*GC + g*C + ci] = weight[co, ci, kh, kw]  (k = kh*3 + kw)
    W[g*C+co, 9*GC]            = bias[co]
    """
    C = weight.shape[0]
    GC = G * C
    w_k = jnp.transpose(weight, (2, 3, 0, 1)).reshape(9, C, C)      # [k, co, ci]
    eye_g = jnp.eye(G, dtype=jnp.float32)
    blk = jnp.einsum('kab,gh->kgahb', w_k, eye_g)                   # (9,G,C,G,C)
    w_main = blk.transpose(1, 2, 0, 3, 4).reshape(GC, 9 * GC)
    bias_col = jnp.tile(bias, G).reshape(GC, 1)
    return jnp.concatenate([w_main, bias_col], axis=1).astype(jnp.float32)


def _build_tap_masks(H, W):
    """(9, H*W) f32 validity masks implementing 'same' zero padding."""
    HW = H * W
    hw = jnp.arange(HW, dtype=jnp.int32)
    h_idx, w_idx = hw // W, hw % W
    rows = []
    for di in (-1, 0, 1):
        for dj in (-1, 0, 1):
            valid = ((h_idx + di >= 0) & (h_idx + di < H) &
                     (w_idx + dj >= 0) & (w_idx + dj < W))
            rows.append(valid)
    return jnp.stack(rows).astype(jnp.float32)


# ------------------------------ wrapper ------------------------------------ #
class ReversibleModulePallas:
    """Pallas equivalent of revlib ReversibleModule wrapping Conv2d(C,C,3,p=1)."""

    def __init__(self, channels, key, io_dtype=jnp.float32):
        kw, kb = jax.random.split(key)
        fan_in = channels * 9
        bound = 1.0 / (fan_in ** 0.5)
        # PyTorch conv weight layout [Cout, Cin, kH, kW].
        self.weight = jax.random.uniform(
            kw, (channels, channels, 3, 3), jnp.float32, -bound, bound)
        self.bias = jax.random.uniform(
            kb, (channels,), jnp.float32, -bound, bound)
        self.io_dtype = io_dtype    # HBM traffic dtype; math stays f32 in-kernel

    def __call__(self, inp):
        # inp: (x0, x1, back_x0, back_x1), each [B, C, H, W] (NCHW).
        x0, x1, back_x0, back_x1 = inp
        B, C, H, W = x1.shape
        HW = H * W
        itemsize = jnp.dtype(self.io_dtype).itemsize
        G = _choose_group(B, C, HW, itemsize=itemsize)

        w_full = _build_fused_weight(self.weight, self.bias, G)   # tiny, resident
        mask9 = _build_tap_masks(H, W)                            # tiny, resident

        # Free reshapes of contiguous NCHW data -- no transposes, no im2col.
        x0_2d = x0.reshape(B * C, HW).astype(self.io_dtype)
        x1_2d = x1.reshape(B * C, HW).astype(self.io_dtype)

        y_2d = _coupling_conv(x0_2d, x1_2d, w_full, mask9,
                              H=H, W=W, group_c=G * C, io_dtype=self.io_dtype)
        y1 = y_2d.reshape(B, C, H, W).astype(x1.dtype)
        # reverse_and_swap returns (x1, x0 + f(x1), back_x0, back_x1).
        return (x1, y1, back_x0, back_x1)


# ------------------------------- main -------------------------------------- #
if __name__ == "__main__":
    key = jax.random.PRNGKey(0)
    k0, k1, k2, k3, kmod = jax.random.split(key, 5)
    B, C, H, W = 2, 4, 16, 16
    x0 = jax.random.normal(k0, (B, C, H, W), jnp.float32)
    x1 = jax.random.normal(k1, (B, C, H, W), jnp.float32)
    back_x0 = jax.random.normal(k2, (B, C, H, W), jnp.float32)
    back_x1 = jax.random.normal(k3, (B, C, H, W), jnp.float32)

    # Reference (same semantics as PyTorch Conv2d NCHW) -- computed up front so
    # it is unaffected by any buffer aliasing of x0.
    mod = ReversibleModulePallas(C, kmod)                       # f32 I/O
    conv_ref = jax.lax.conv_general_dilated(
        x1, mod.weight, window_strides=(1, 1), padding="SAME",
        dimension_numbers=("NCHW", "OIHW", "NCHW"))
    y1_ref = x0 + conv_ref + mod.bias.reshape(1, C, 1, 1)

    out = jax.block_until_ready(mod((x0, x1, back_x0, back_x1)))
    assert jnp.allclose(out[0], x1)
    assert jnp.allclose(out[1], y1_ref, atol=1e-4, rtol=1e-4)
    assert jnp.allclose(out[2], back_x0)
    assert jnp.allclose(out[3], back_x1)

    # bf16 HBM-I/O variant (memory-bound win on v5e/v6e/v7x); accumulation and
    # mask math stay f32 in-kernel, so only input/output quantization remains.
    mod_bf16 = ReversibleModulePallas(C, kmod, io_dtype=jnp.bfloat16)
    out_bf = jax.block_until_ready(mod_bf16((x0, x1, back_x0, back_x1)))
    assert jnp.allclose(out_bf[1].astype(jnp.float32), y1_ref, atol=1e-1, rtol=1e-1)

    print("KERNEL_OK")
</pallas_src>

<mosaic_0001>
module attributes {stable_mosaic.version = 11 : i64} {
  func.func @_coupling_conv_kernel(%arg0: i32, %arg1: memref<8x256xf32, #tpu.memory_space<vmem>>, %arg2: memref<8x256xf32, #tpu.memory_space<vmem>>, %arg3: memref<8x73xf32, #tpu.memory_space<vmem>>, %arg4: memref<9x256xf32, #tpu.memory_space<vmem>>, %arg5: memref<8x256xf32, #tpu.memory_space<vmem>>) attributes {dimension_semantics = [#tpu.dimension_semantics<parallel>], iteration_bounds = array<i64: 1>, scalar_prefetch = 0 : i64, scratch_operands = 0 : i64, tpu.core_type = #tpu.core_type<tc>, window_params = [{transform_indices = @transform_0, window_bounds = array<i64: 8, 256>}, {transform_indices = @transform_1, window_bounds = array<i64: 8, 256>}, {pipeline_mode = #tpu.pipeline_mode<synchronous>, transform_indices = @transform_2, window_bounds = array<i64: 8, 73>}, {pipeline_mode = #tpu.pipeline_mode<synchronous>, transform_indices = @transform_3, window_bounds = array<i64: 9, 256>}, {transform_indices = @transform_4, window_bounds = array<i64: 8, 256>}]} {
    %c0 = arith.constant 0 : index
    %c0_0 = arith.constant 0 : index
    %0 = vector.load %arg2[%c0, %c0_0] : memref<8x256xf32, #tpu.memory_space<vmem>>, vector<8x256xf32>
    %c0_1 = arith.constant 0 : index
    %c0_2 = arith.constant 0 : index
    %1 = vector.load %arg1[%c0_1, %c0_2] : memref<8x256xf32, #tpu.memory_space<vmem>>, vector<8x256xf32>
    %c0_3 = arith.constant 0 : index
    %c0_4 = arith.constant 0 : index
    %2 = vector.load %arg4[%c0_3, %c0_4] : memref<9x256xf32, #tpu.memory_space<vmem>>, vector<9x256xf32>
    %c17_i32 = arith.constant 17 : i32
    %3 = tpu.dynamic_rotate %0 by %c17_i32 dim 1 : vector<8x256xf32>, i32 -> vector<8x256xf32>
    %4 = vector.extract_strided_slice %2 {offsets = [0, 0], sizes = [1, 256], strides = [1, 1]} : vector<9x256xf32> to vector<1x256xf32>
    %5 = vector.broadcast %4 : vector<1x256xf32> to vector<8x256xf32>
    %6 = arith.mulf %3, %5 : vector<8x256xf32>
    %c16_i32 = arith.constant 16 : i32
    %7 = tpu.dynamic_rotate %0 by %c16_i32 dim 1 : vector<8x256xf32>, i32 -> vector<8x256xf32>
    %8 = vector.extract_strided_slice %2 {offsets = [1, 0], sizes = [1, 256], strides = [1, 1]} : vector<9x256xf32> to vector<1x256xf32>
    %9 = vector.broadcast %8 : vector<1x256xf32> to vector<8x256xf32>
    %10 = arith.mulf %7, %9 : vector<8x256xf32>
    %c15_i32 = arith.constant 15 : i32
    %11 = tpu.dynamic_rotate %0 by %c15_i32 dim 1 : vector<8x256xf32>, i32 -> vector<8x256xf32>
    %12 = vector.extract_strided_slice %2 {offsets = [2, 0], sizes = [1, 256], strides = [1, 1]} : vector<9x256xf32> to vector<1x256xf32>
    %13 = vector.broadcast %12 : vector<1x256xf32> to vector<8x256xf32>
    %14 = arith.mulf %11, %13 : vector<8x256xf32>
    %c1_i32 = arith.constant 1 : i32
    %15 = tpu.dynamic_rotate %0 by %c1_i32 dim 1 : vector<8x256xf32>, i32 -> vector<8x256xf32>
    %16 = vector.extract_strided_slice %2 {offsets = [3, 0], sizes = [1, 256], strides = [1, 1]} : vector<9x256xf32> to vector<1x256xf32>
    %17 = vector.broadcast %16 : vector<1x256xf32> to vector<8x256xf32>
    %18 = arith.mulf %15, %17 : vector<8x256xf32>
    %19 = vector.extract_strided_slice %2 {offsets = [4, 0], sizes = [1, 256], strides = [1, 1]} : vector<9x256xf32> to vector<1x256xf32>
    %20 = vector.broadcast %19 : vector<1x256xf32> to vector<8x256xf32>
    %21 = arith.mulf %0, %20 : vector<8x256xf32>
    %c255_i32 = arith.constant 255 : i32
    %22 = tpu.dynamic_rotate %0 by %c255_i32 dim 1 : vector<8x256xf32>, i32 -> vector<8x256xf32>
    %23 = vector.extract_strided_slice %2 {offsets = [5, 0], sizes = [1, 256], strides = [1, 1]} : vector<9x256xf32> to vector<1x256xf32>
    %24 = vector.broadcast %23 : vector<1x256xf32> to vector<8x256xf32>
    %25 = arith.mulf %22, %24 : vector<8x256xf32>
    %c241_i32 = arith.constant 241 : i32
    %26 = tpu.dynamic_rotate %0 by %c241_i32 dim 1 : vector<8x256xf32>, i32 -> vector<8x256xf32>
    %27 = vector.extract_strided_slice %2 {offsets = [6, 0], sizes = [1, 256], strides = [1, 1]} : vector<9x256xf32> to vector<1x256xf32>
    %28 = vector.broadcast %27 : vector<1x256xf32> to vector<8x256xf32>
    %29 = arith.mulf %26, %28 : vector<8x256xf32>
    %c240_i32 = arith.constant 240 : i32
    %30 = tpu.dynamic_rotate %0 by %c240_i32 dim 1 : vector<8x256xf32>, i32 -> vector<8x256xf32>
    %31 = vector.extract_strided_slice %2 {offsets = [7, 0], sizes = [1, 256], strides = [1, 1]} : vector<9x256xf32> to vector<1x256xf32>
    %32 = vector.broadcast %31 : vector<1x256xf32> to vector<8x256xf32>
    %33 = arith.mulf %30, %32 : vector<8x256xf32>
    %c239_i32 = arith.constant 239 : i32
    %34 = tpu.dynamic_rotate %0 by %c239_i32 dim 1 : vector<8x256xf32>, i32 -> vector<8x256xf32>
    %35 = vector.extract_strided_slice %2 {offsets = [8, 0], sizes = [1, 256], strides = [1, 1]} : vector<9x256xf32> to vector<1x256xf32>
    %36 = vector.broadcast %35 : vector<1x256xf32> to vector<8x256xf32>
    %37 = arith.mulf %34, %36 : vector<8x256xf32>
    %cst = arith.constant 1.000000e+00 : f32
    %38 = vector.broadcast %cst : f32 to vector<1x256xf32>
    %39 = tpu.concatenate %6, %10, %14, %18, %21, %25, %29, %33, %37, %38 in 0 : vector<8x256xf32>, vector<8x256xf32>, vector<8x256xf32>, vector<8x256xf32>, vector<8x256xf32>, vector<8x256xf32>, vector<8x256xf32>, vector<8x256xf32>, vector<8x256xf32>, vector<1x256xf32> -> vector<73x256xf32>
    %c0_5 = arith.constant 0 : index
    %c0_6 = arith.constant 0 : index
    %40 = vector.load %arg3[%c0_5, %c0_6] : memref<8x73xf32, #tpu.memory_space<vmem>>, vector<8x73xf32>
    %cst_7 = arith.constant dense<0.000000e+00> : vector<8x256xf32>
    %41 = tpu.matmul %40, %39, %cst_7 {dimension_numbers = #tpu.dot_dimension_numbers<[1], [0], [0], [1], [0, 0, 1, 1], [], []>} : vector<8x73xf32>, vector<73x256xf32>, vector<8x256xf32> -> vector<8x256xf32>
    %42 = arith.addf %1, %41 : vector<8x256xf32>
    %c0_8 = arith.constant 0 : index
    %c0_9 = arith.constant 0 : index
    %43 = vector.load %arg5[%c0_8, %c0_9] : memref<8x256xf32, #tpu.memory_space<vmem>>, vector<8x256xf32>
    tpu.vector_store %arg5[%c0_8, %c0_9], %42 {strides = array<i32>} : memref<8x256xf32, #tpu.memory_space<vmem>>, vector<8x256xf32>,
    return
  }
  func.func @transform_0(%arg0: i32) -> (i32, i32) {
    %c0_i32 = arith.constant 0 : i32
    %c0_i32_0 = arith.constant 0 : i32
    return %arg0, %c0_i32 : i32, i32
  }
  func.func @transform_1(%arg0: i32) -> (i32, i32) {
    %c0_i32 = arith.constant 0 : i32
    %c0_i32_0 = arith.constant 0 : i32
    return %arg0, %c0_i32 : i32, i32
  }
  func.func @transform_2(%arg0: i32) -> (i32, i32) {
    %c0_i32 = arith.constant 0 : i32
    %c0_i32_0 = arith.constant 0 : i32
    %c0_i32_1 = arith.constant 0 : i32
    return %c0_i32, %c0_i32_0 : i32, i32
  }
  func.func @transform_3(%arg0: i32) -> (i32, i32) {
    %c0_i32 = arith.constant 0 : i32
    %c0_i32_0 = arith.constant 0 : i32
    %c0_i32_1 = arith.constant 0 : i32
    return %c0_i32, %c0_i32_0 : i32, i32
  }
  func.func @transform_4(%arg0: i32) -> (i32, i32) {
    %c0_i32 = arith.constant 0 : i32
    %c0_i32_0 = arith.constant 0 : i32
    return %arg0, %c0_i32 : i32, i32
  }
}

</mosaic_0001>

<llo_original>
// kernel: tpu_custom_call.1
$region0: #{tpu_custom_call.1}
  #allocation0 [shape = 'u32[]', space=smem, size = 0x4, offset = 0x4, fixed_abs, tag = 'smem constant byte address 0x4 - core index']
  #allocation1 [shape = 'u32[144,128]{1,0:T(1,128)}', space=vmem, size = 0x12000, scoped, tag = 'internal scratch']
  %s0 = inlined_call_operand.hbm [shape: f32[8,256], index: 0, kind: input, shape index: {}, may-alias: {0,4}]
  %s1 = inlined_call_operand.hbm [shape: f32[8,256], index: 1, kind: input, shape index: {}]
  %s2 = inlined_call_operand.hbm [shape: f32[8,73], index: 2, kind: input, shape index: {}]
  %s3 = inlined_call_operand.vmem [shape: f32[9,256], index: 3, kind: input, shape index: {}]
  %s4 = inlined_call_operand.hbm [shape: f32[8,256], index: 4, kind: output, shape index: {}, may-alias: {0,4}]
  %s5 = sld [smem:[#allocation0]]
  $region38: #{tpu_custom_call.1} parent=0
    _
  %s7 = ssub.s32 1, %s5
  %s8 = scalar_select 0, %s7, %s5
  $region1: #{tpu_custom_call.1} parent=0
    #allocation2 [shape = 'u8[8192]{0}', space=vmem, size = 0x2000, scoped, tag = 'input window, operand 0, single buffered']
    #allocation3 [shape = 's32[1]{0}', space=sflag, size = 0x4, scoped, tag = 'scoped memory for tpu_custom_call.1']
    #allocation4 [shape = 's32[1]{0}', space=sflag, size = 0x4, scoped, tag = 'scoped memory for tpu_custom_call.1']
    #allocation5 [shape = 'u8[8192]{0}', space=vmem, size = 0x2000, scoped, tag = 'input window, operand 1, single buffered']
    #allocation6 [shape = 's32[1]{0}', space=sflag, size = 0x4, scoped, tag = 'scoped memory for tpu_custom_call.1']
    #allocation7 [shape = 'u8[4096]{0}', space=vmem, size = 0x1000, scoped, tag = 'input window, operand 2, single buffered']
    #allocation8 [shape = 'u8[8192]{0}', space=vmem, size = 0x2000, scoped, tag = 'output window, operand 0, single buffered']
    %9 = vsyncpa [#allocation3], 0
    %10 = vsyncpa [#allocation6], 0
    %11 = vsyncpa [#allocation4], 0
    // Predicated region
    $region2: #{tpu_custom_call.1} parent=1 // pred_check
      _
    $region3: #{tpu_custom_call.1} parent=1 // pred_check_branch
      %13 = sbr.rel (0) target = $region5
    $region4: #{tpu_custom_call.1} parent=1 // pred_region
      %s15 = ssub.s32 256, 256
      %16 = vsyncadd [#allocation3], %s15
      %s18 = sshll.u32 [#allocation2], 4
      %s19 = int_to_ptr.vmem [resolvable:$true] %s18
      %21 = dma.hbm_to_vmem [thread:$0]  %s0, 256, %s19, [#allocation3]
    $region5: #{tpu_custom_call.1} parent=1 // pred_fallthru
      _
    // Predicated region
    $region6: #{tpu_custom_call.1} parent=1 // pred_check
      _
    $region7: #{tpu_custom_call.1} parent=1 // pred_check_branch
      %23 = sbr.rel (0) target = $region9
    $region8: #{tpu_custom_call.1} parent=1 // pred_region
      %s25 = ssub.s32 256, 256
      %26 = vsyncadd [#allocation6], %s25
      %s28 = sshll.u32 [#allocation5], 4
      %s29 = int_to_ptr.vmem [resolvable:$true] %s28
      %31 = dma.hbm_to_vmem [thread:$0]  %s1, 256, %s29, [#allocation6]
    $region9: #{tpu_custom_call.1} parent=1 // pred_fallthru
      _
    // Predicated region
    $region10: #{tpu_custom_call.1} parent=1 // pred_check
      _
    $region11: #{tpu_custom_call.1} parent=1 // pred_check_branch
      %33 = sbr.rel (0) target = $region13
    $region12: #{tpu_custom_call.1} parent=1 // pred_region
      %s35 = ssub.s32 128, 128
      %36 = vsyncadd [#allocation6], %s35
      %s38 = sshll.u32 [#allocation7], 4
      %s39 = int_to_ptr.vmem [resolvable:$true] %s38
      %41 = dma.hbm_to_vmem [thread:$0]  %s2, 128, %s39, [#allocation6]
    $region13: #{tpu_custom_call.1} parent=1 // pred_fallthru
      _
    // Predicated region
    $region14: #{tpu_custom_call.1} parent=1 // pred_check
      _
    $region15: #{tpu_custom_call.1} parent=1 // pred_check_branch
      %43 = sbr.rel (0) target = $region17
    $region16: #{tpu_custom_call.1} parent=1 // pred_region
      _
    $region17: #{tpu_custom_call.1} parent=1 // pred_fallthru
      _
    // Predicated region
    $region18: #{tpu_custom_call.1} parent=1 // pred_check
      _
    $region19: #{tpu_custom_call.1} parent=1 // pred_check_branch
      %45 = sbr.rel (0) target = $region21
    $region20: #{tpu_custom_call.1} parent=1 // pred_region
      %46 = dma.done [#allocation3], 256
    $region21: #{tpu_custom_call.1} parent=1 // pred_fallthru
      _
    // Predicated region
    $region22: #{tpu_custom_call.1} parent=1 // pred_check
      _
    $region23: #{tpu_custom_call.1} parent=1 // pred_check_branch
      %48 = sbr.rel (0) target = $region25
    $region24: #{tpu_custom_call.1} parent=1 // pred_region
      %49 = dma.done [#allocation6], 256
    $region25: #{tpu_custom_call.1} parent=1 // pred_fallthru
      _
    // Predicated region
    $region26: #{tpu_custom_call.1} parent=1 // pred_check
      _
    $region27: #{tpu_custom_call.1} parent=1 // pred_check_branch
      %51 = sbr.rel (0) target = $region29
    $region28: #{tpu_custom_call.1} parent=1 // pred_region
      %52 = dma.done [#allocation6], 128
    $region29: #{tpu_custom_call.1} parent=1 // pred_fallthru
      _
    %v53 = vld [vmem:[#allocation5] sm:$0xff]
    %v54 = vld [vmem:[#allocation5 + $0x8] sm:$0xff]
    %v55 = vld [vmem:[#allocation2] sm:$0xff]
    %v56 = vld [vmem:[#allocation2 + $0x8] sm:$0xff]
    %v57 = vld [vmem:[%s3] sm:$0xff]
    %v58 = vld [vmem:[%s3 + $0x8] sm:$0xff]
    %v59 = vld [vmem:[%s3 + $0x10] sm:$0x1]
    %v60 = vld [vmem:[%s3 + $0x18] sm:$0x1]
    %61 = vrot.lane.b32.xlu0 %v53, 17
    %v62 = vpop.permute.xlu0 %61
    %63 = vrot.lane.b32.xlu0 %v54, 17
    %v64 = vpop.permute.xlu0 %63
    %v65 = vlaneseq
    %v66 = vand.u32 %v65, 127
    %vm67 = vcmp.lt.s32.totalorder %v66, 17
    %v68 = vsel %vm67, %v62, %v64
    %v69 = vsel %vm67, %v64, %v62
    %v70 = vlaneseq
    %v71 = vshrl.u32 %v70, 7
    %v72 = vsub.s32 0, %v71
    %v73 = vrot.slane %v57, %v72
    %v74 = vlaneseq
    %v75 = vshrl.u32 %v74, 7
    %v76 = vsub.s32 0, %v75
    %v77 = vrot.slane %v58, %v76
    %v78 = vmul.f32 %v69, %v73
    %v79 = vmul.f32 %v68, %v77
    %80 = vrot.lane.b32.xlu0 %v53, 16
    %v81 = vpop.permute.xlu0 %80
    %82 = vrot.lane.b32.xlu0 %v54, 16
    %v83 = vpop.permute.xlu0 %82
    %vm84 = vcmp.lt.s32.totalorder %v66, 16
    %v85 = vsel %vm84, %v81, %v83
    %v86 = vsel %vm84, %v83, %v81
    %v87 = vlaneseq
    %v88 = vshrl.u32 %v87, 7
    %v89 = vsub.s32 1, %v88
    %v90 = vrot.slane %v57, %v89
    %v91 = vlaneseq
    %v92 = vshrl.u32 %v91, 7
    %v93 = vsub.s32 1, %v92
    %v94 = vrot.slane %v58, %v93
    %v95 = vmul.f32 %v86, %v90
    %v96 = vmul.f32 %v85, %v94
    %97 = vrot.lane.b32.xlu0 %v53, 15
    %v98 = vpop.permute.xlu0 %97
    %99 = vrot.lane.b32.xlu0 %v54, 15
    %v100 = vpop.permute.xlu0 %99
    %vm101 = vcmp.lt.s32.totalorder %v66, 15
    %v102 = vsel %vm101, %v98, %v100
    %v103 = vsel %vm101, %v100, %v98
    %v104 = vlaneseq
    %v105 = vshrl.u32 %v104, 7
    %v106 = vsub.s32 2, %v105
    %v107 = vrot.slane %v57, %v106
    %v108 = vlaneseq
    %v109 = vshrl.u32 %v108, 7
    %v110 = vsub.s32 2, %v109
    %v111 = vrot.slane %v58, %v110
    %v112 = vmul.f32 %v103, %v107
    %v113 = vmul.f32 %v102, %v111
    %114 = vrot.lane.b32.xlu0 %v53, 1
    %v115 = vpop.permute.xlu0 %114
    %116 = vrot.lane.b32.xlu0 %v54, 1
    %v117 = vpop.permute.xlu0 %116
    %vm118 = vcmp.lt.s32.totalorder %v66, 1
    %v119 = vsel %vm118, %v115, %v117
    %v120 = vsel %vm118, %v117, %v115
    %v121 = vlaneseq
    %v122 = vshrl.u32 %v121, 7
    %v123 = vsub.s32 3, %v122
    %v124 = vrot.slane %v57, %v123
    %v125 = vlaneseq
    %v126 = vshrl.u32 %v125, 7
    %v127 = vsub.s32 3, %v126
    %v128 = vrot.slane %v58, %v127
    %v129 = vmul.f32 %v120, %v124
    %v130 = vmul.f32 %v119, %v128
    %v131 = vlaneseq
    %v132 = vshrl.u32 %v131, 7
    %v133 = vsub.s32 4, %v132
    %v134 = vrot.slane %v57, %v133
    %v135 = vlaneseq
    %v136 = vshrl.u32 %v135, 7
    %v137 = vsub.s32 4, %v136
    %v138 = vrot.slane %v58, %v137
    %v139 = vmul.f32 %v53, %v134
    %v140 = vmul.f32 %v54, %v138
    %141 = vrot.lane.b32.xlu0 %v53, 127
    %v142 = vpop.permute.xlu0 %141
    %143 = vrot.lane.b32.xlu0 %v54, 127
    %v144 = vpop.permute.xlu0 %143
    %vm145 = vcmp.lt.s32.totalorder %v66, 127
    %v146 = vsel %vm145, %v142, %v144
    %v147 = vsel %vm145, %v144, %v142
    %v148 = vlaneseq
    %v149 = vshrl.u32 %v148, 7
    %v150 = vsub.s32 5, %v149
    %v151 = vrot.slane %v57, %v150
    %v152 = vlaneseq
    %v153 = vshrl.u32 %v152, 7
    %v154 = vsub.s32 5, %v153
    %v155 = vrot.slane %v58, %v154
    %v156 = vmul.f32 %v146, %v151
    %v157 = vmul.f32 %v147, %v155
    %158 = vrot.lane.b32.xlu0 %v53, 113
    %v159 = vpop.permute.xlu0 %158
    %160 = vrot.lane.b32.xlu0 %v54, 113
    %v161 = vpop.permute.xlu0 %160
    %vm162 = vcmp.lt.s32.totalorder %v66, 113
    %v163 = vsel %vm162, %v159, %v161
    %v164 = vsel %vm162, %v161, %v159
    %v165 = vlaneseq
    %v166 = vshrl.u32 %v165, 7
    %v167 = vsub.s32 6, %v166
    %v168 = vrot.slane %v57, %v167
    %v169 = vlaneseq
    %v170 = vshrl.u32 %v169, 7
    %v171 = vsub.s32 6, %v170
    %v172 = vrot.slane %v58, %v171
    %v173 = vmul.f32 %v163, %v168
    %v174 = vmul.f32 %v164, %v172
    %175 = vrot.lane.b32.xlu0 %v53, 112
    %v176 = vpop.permute.xlu0 %175
    %177 = vrot.lane.b32.xlu0 %v54, 112
    %v178 = vpop.permute.xlu0 %177
    %vm179 = vcmp.lt.s32.totalorder %v66, 112
    %v180 = vsel %vm179, %v176, %v178
    %v181 = vsel %vm179, %v178, %v176
    %v182 = vlaneseq
    %v183 = vshrl.u32 %v182, 7
    %v184 = vsub.s32 7, %v183
    %v185 = vrot.slane %v57, %v184
    %v186 = vlaneseq
    %v187 = vshrl.u32 %v186, 7
    %v188 = vsub.s32 7, %v187
    %v189 = vrot.slane %v58, %v188
    %v190 = vmul.f32 %v180, %v185
    %v191 = vmul.f32 %v181, %v189
    %192 = vrot.lane.b32.xlu0 %v53, 111
    %v193 = vpop.permute.xlu0 %192
    %194 = vrot.lane.b32.xlu0 %v54, 111
    %v195 = vpop.permute.xlu0 %194
    %vm196 = vcmp.lt.s32.totalorder %v66, 111
    %v197 = vsel %vm196, %v193, %v195
    %v198 = vsel %vm196, %v195, %v193
    %v199 = vlaneseq
    %v200 = vshrl.u32 %v199, 7
    %v201 = vsub.s32 0, %v200
    %v202 = vrot.slane %v59, %v201
    %v203 = vlaneseq
    %v204 = vshrl.u32 %v203, 7
    %v205 = vsub.s32 0, %v204
    %v206 = vrot.slane %v60, %v205
    %v207 = vmul.f32 %v197, %v202
    %v208 = vmul.f32 %v198, %v206
    %v209 = vld [vmem:[#allocation7] sm:$0xff]
    %vm210 = vcmask 596992
    %v212 = vsel %vm210, %v209, 0
    %vm214 = vcmask 1040384
    %v216 = vsel %vm214, 1.0, 0
    %218 = vmatprep.subr.mxu0 0.0
    %219 = vmatpush1.msra.mxu0 0.0
    %220 = vmatprep.subr.mxu0 0.0
    %221 = vmatpush1.msra.mxu0 0.0
    %222 = vmatprep.subr.mxu0 0.0
    %223 = vmatpush1.msra.mxu0 0.0
    %224 = vmatprep.subr.mxu0 0.0
    %225 = vmatpush1.msra.mxu0 0.0
    %226 = vmatprep.subr.mxu0 0.0
    %227 = vmatpush1.msra.mxu0 0.0
    %228 = vmatprep.subr.mxu0 0.0
    %229 = vmatpush1.msra.mxu0 0.0
    %230 = vmatprep.subr.mxu0 %v216
    %231 = vmatpush1.msra.mxu0 %v216
    %232 = vmatprep.subr.mxu0 %v208
    %233 = vmatpush1.msra.mxu0 %v207
    %234 = vmatprep.subr.mxu0 %v191
    %235 = vmatpush1.msra.mxu0 %v190
    %236 = vmatprep.subr.mxu0 %v174
    %237 = vmatpush1.msra.mxu0 %v173
    %238 = vmatprep.subr.mxu0 %v157
    %239 = vmatpush1.msra.mxu0 %v156
    %240 = vmatprep.subr.mxu0 %v140
    %241 = vmatpush1.msra.mxu0 %v139
    %242 = vmatprep.subr.mxu0 %v130
    %243 = vmatpush1.msra.mxu0 %v129
    %244 = vmatprep.subr.mxu0 %v113
    %245 = vmatpush1.msra.mxu0 %v112
    %246 = vmatprep.subr.mxu0 %v96
    %247 = vmatpush1.msra.mxu0 %v95
    %248 = vmatprep.subr.mxu0 %v79
    %249 = vmatpush1.msra.mxu0 %v78
    %250 = vmatprep.subr.mxu0 0.0
    %251 = vmatpush2.msra.mxu0 0.0
    %252 = vmatprep.subr.mxu0 0.0
    %253 = vmatpush2.msra.mxu0 0.0
    %254 = vmatprep.subr.mxu0 0.0
    %255 = vmatpush2.msra.mxu0 0.0
    %256 = vmatprep.subr.mxu0 0.0
    %257 = vmatpush2.msra.mxu0 0.0
    %258 = vmatprep.subr.mxu0 0.0
    %259 = vmatpush2.msra.mxu0 0.0
    %260 = vmatprep.subr.mxu0 0.0
    %261 = vmatpush2.msra.mxu0 0.0
    %262 = vmatprep.subr.mxu0 0.0
    %263 = vmatpush2.msra.mxu0 0.0
    %264 = vmatprep.subr.mxu0 0.0
    %265 = vmatpush2.msra.mxu0 0.0
    %266 = vmatprep.subr.mxu0 0.0
    %267 = vmatpush2.msra.mxu0 0.0
    %268 = vmatprep.subr.mxu0 0.0
    %269 = vmatpush2.msra.mxu0 0.0
    %270 = vmatprep.subr.mxu0 0.0
    %271 = vmatpush2.msra.mxu0 0.0
    %272 = vmatprep.subr.mxu0 0.0
    %273 = vmatpush2.msra.mxu0 0.0
    %274 = vmatprep.subr.mxu0 0.0
    %275 = vmatpush2.msra.mxu0 0.0
    %276 = vmatprep.subr.mxu0 0.0
    %277 = vmatpush2.msra.mxu0 0.0
    %278 = vmatprep.subr.mxu0 0.0
    %279 = vmatpush2.msra.mxu0 0.0
    %280 = vmatprep.subr.mxu0 0.0
    %281 = vmatpush2.msra.mxu0 0.0
    %282 = vmatprep.mubr.f32.mxu0 0.0
    %283 = vmatmul.mubr.f32.gmra.mxu0 %v212
    %v284 = vpop.f32.mrf.mxu0
    %v285 = vadd.f32 0.0, %v284
    %v286 = vpop.f32.mrf.mxu0
    %v287 = vadd.f32 0.0, %v286
    %288 = vdwg.mxu0
    %v289 = vadd.f32 %v55, %v285
    %v290 = vadd.f32 %v56, %v287
    %291 = vst [vmem:[#allocation8] sm:$0xff] %v289
    %292 = vst [vmem:[#allocation8 + $0x8] sm:$0xff] %v290
    // Predicated region
    $region30: #{tpu_custom_call.1} parent=1 // pred_check
      _
    $region31: #{tpu_custom_call.1} parent=1 // pred_check_branch
      %294 = sbr.rel (0) target = $region33
    $region32: #{tpu_custom_call.1} parent=1 // pred_region
      %s296 = ssub.s32 256, 256
      %297 = vsyncadd [#allocation4], %s296
      %s299 = sshll.u32 [#allocation8], 4
      %s300 = int_to_ptr.vmem [resolvable:$true] %s299
      %302 = dma.vmem_to_hbm [thread:$0]  %s300, 256, %s4, [#allocation4]
    $region33: #{tpu_custom_call.1} parent=1 // pred_fallthru
      _
    // Predicated region
    $region34: #{tpu_custom_call.1} parent=1 // pred_check
      _
    $region35: #{tpu_custom_call.1} parent=1 // pred_check_branch
      %304 = sbr.rel (0) target = $region37
    $region36: #{tpu_custom_call.1} parent=1 // pred_region
      %305 = dma.done [#allocation4], 256
    $region37: #{tpu_custom_call.1} parent=1 // pred_fallthru
      _
    %306 = vsyncpa [#allocation3], 1
    %307 = vsyncpa [#allocation6], 1
    %308 = vsyncpa [#allocation4], 1

</llo_original>
